<compile_context>
chip_gen: v6e
topology: v6e:2x2x1
jax: 0.10.0
libtpu: 0.0.40
codegen_flags: <defaults>
</compile_context>

<pallas_src>
import functools
import math

import jax
import jax.numpy as jnp
from jax.experimental import pallas as pl
from jax.experimental.pallas import tpu as pltpu


def _rmsnorm_kernel(x_ref, w_ref, o_ref, *, eps, inv_dim):
    # x_ref: (TR, D) tile of rows; w_ref: (1, D) f32 weight, broadcast over rows.
    x = x_ref[...].astype(jnp.float32)                        # x.float()
    # sum * (1/dim) instead of mean: the reciprocal is a Python constant, the
    # cross-lane sum goes to the XLU and rsqrt to the EUP, keeping the VPU
    # free. inv_dim uses the *true* dim, so any internal lane padding Mosaic
    # adds for non-128 dims never leaks into the statistics.
    ms = jnp.sum(x * x, axis=-1, keepdims=True) * inv_dim     # mean(x^2, -1)
    normed = x * jax.lax.rsqrt(ms + eps)                      # _norm(x.float())
    # Weight multiply in f32 followed by a single downcast: bit-identical to
    # llama's cast-then-multiply for f32 inputs; for bf16 it saves one VPU
    # pack/unpack per element with only a rounding-order difference.
    o_ref[...] = (normed * w_ref[...]).astype(o_ref.dtype)    # * weight


def _round_up(n: int, m: int) -> int:
    return ((n + m - 1) // m) * m


def _round_down(n: int, m: int) -> int:
    return (n // m) * m


def _sublane_multiple(dtype) -> int:
    # Sublane packing for the dtype: 8 (32-bit), 16 (16-bit), 32 (8-bit).
    return {4: 8, 2: 16, 1: 32}.get(jnp.dtype(dtype).itemsize, 8)


def _choose_row_tile(rows: int, dim_p: int, dtype) -> int:
    """Sublane-aligned row tile: big tiles for DMA efficiency, enough grid
    steps for megacore sharding + pipelining."""
    sub = _sublane_multiple(dtype)
    itemsize = jnp.dtype(dtype).itemsize
    row_bytes = dim_p * itemsize
    # ~8 MiB x tiles keep the ~0.35 us/step pipeline overhead negligible even
    # at v7x's 3.2 TB/s, while double-buffered in+out stays ~32 MiB (fits
    # v7x's 64 MiB VMEM with headroom; trivially fits v5e/v6e's 128 MiB).
    tr = max(sub, _round_down((8 << 20) // row_bytes, sub))
    # Prefer >= 8 grid steps (>= 3-4 blocks per TensorCore on v7x megacore) so
    # writeback of block i overlaps the fetch of block i+1 — but never shrink
    # a tile below ~2 MiB, where per-step overhead starts to show on v5e/v6e.
    floor = max(sub, _round_down((2 << 20) // row_bytes, sub))
    want = _round_up(pl.cdiv(rows, 8), sub)
    tr = min(tr, max(floor, want))
    if tr >= rows:
        # Single block covering all rows; a block dim equal to the full array
        # dim is legal even when rows is not sublane-aligned.
        tr = rows
    return tr


def rmsnorm(x, weight, eps: float = 1e-6, *, row_tile=None):
    """RMSNorm over the last axis of x. x: (..., dim); weight: (dim,).

    row_tile is a test-only override for the row tile size.
    """
    orig_shape = x.shape
    dim = orig_shape[-1]
    rows = int(math.prod(orig_shape[:-1])) if len(orig_shape) > 1 else 1

    itemsize = jnp.dtype(x.dtype).itemsize
    dim_p = _round_up(dim, 128)     # lane-padded width, VMEM accounting only
    tr = row_tile if row_tile is not None else _choose_row_tile(rows, dim_p, x.dtype)
    grid = (pl.cdiv(rows, tr),)     # ragged last block handled by Pallas

    x2d = x.reshape(rows, dim)      # leading-dim collapse; no extra HBM pass
    # Weight kept in f32 so the in-kernel multiply happens before the single
    # downcast. (PyTorch would promote to the weight dtype for bf16 x; here
    # the output stays in x.dtype like the original reference wrapper.)
    w2d = weight.reshape(1, dim).astype(jnp.float32)

    # VMEM budget: double-buffered in+out tiles dominate; f32 temporaries are
    # strip-mined through vregs by Mosaic, so only headroom is added for them.
    # Cap below v7x's 64 MiB physical VMEM to leave compiler/runtime headroom.
    block_bytes = tr * dim_p * itemsize
    vmem_limit = min(max(4 * block_bytes + (16 << 20), 32 << 20), 56 << 20)

    # Purely HBM-bound: one read + one write of x (true, unpadded shape),
    # plus the tiny weight; one rsqrt per row.
    cost = pl.CostEstimate(
        flops=4 * rows * dim,
        transcendentals=rows,
        bytes_accessed=2 * rows * dim * itemsize + dim * 4,
    )

    kernel = functools.partial(_rmsnorm_kernel, eps=eps, inv_dim=1.0 / dim)

    out = pl.pallas_call(
        kernel,
        out_shape=jax.ShapeDtypeStruct((rows, dim), x.dtype),
        grid_spec=pltpu.PrefetchScalarGridSpec(
            num_scalar_prefetch=0,
            grid=grid,
            in_specs=[
                pl.BlockSpec((tr, dim), lambda i: (i, 0)),   # x row tile
                pl.BlockSpec((1, dim), lambda i: (0, 0)),    # weight (resident)
            ],
            out_specs=pl.BlockSpec((tr, dim), lambda i: (i, 0)),
        ),
        compiler_params=pltpu.CompilerParams(
            dimension_semantics=("parallel",),
            vmem_limit_bytes=int(vmem_limit),
        ),
        cost_estimate=cost,
    )(x2d, w2d)

    return out.reshape(orig_shape)


def rmsnorm_ref(x, weight, eps=1e-6):
    xf = x.astype(jnp.float32)
    normed = xf * jax.lax.rsqrt(jnp.mean(xf * xf, axis=-1, keepdims=True) + eps)
    return (normed * weight.astype(jnp.float32)).astype(x.dtype)


if __name__ == "__main__":
    key = jax.random.PRNGKey(0)
    k1, k2, k3, k4, kw = jax.random.split(key, 5)

    # Case 1: small llama-like shape; dim < 128 exercises the unpadded lane path.
    x1 = jax.random.normal(k1, (2, 8, 32), dtype=jnp.float32)
    w1 = jnp.ones((32,), dtype=jnp.float32)   # nn.Parameter(torch.ones(dim))
    o1 = jax.block_until_ready(rmsnorm(x1, w1, eps=1e-6))
    assert o1.shape == x1.shape and o1.dtype == x1.dtype
    assert jnp.allclose(o1, rmsnorm_ref(x1, w1), atol=1e-5, rtol=1e-5)

    # Case 2: ragged row count (15) and non-128 dim (48): single full-array block.
    x2 = jax.random.normal(k2, (3, 5, 48), dtype=jnp.float32)
    w2 = jax.random.normal(kw, (48,), dtype=jnp.float32) * 0.1 + 1.0
    o2 = jax.block_until_ready(rmsnorm(x2, w2, eps=1e-6))
    assert o2.shape == x2.shape and o2.dtype == x2.dtype
    assert jnp.allclose(o2, rmsnorm_ref(x2, w2), atol=1e-5, rtol=1e-5)

    # Case 3: multi-block grid with a partial last block (21 rows, tile of 8)
    # to exercise the ragged-row path with no wrapper-side pad/slice.
    x3 = jax.random.normal(k3, (3, 7, 128), dtype=jnp.float32)
    w3 = jax.random.normal(kw, (128,), dtype=jnp.float32) * 0.1 + 1.0
    o3 = jax.block_until_ready(rmsnorm(x3, w3, eps=1e-6, row_tile=8))
    assert jnp.allclose(o3, rmsnorm_ref(x3, w3), atol=1e-5, rtol=1e-5)

    # Case 4: bf16 activations with an f32 weight (multiply in f32, one downcast).
    x4 = jax.random.normal(k4, (2, 8, 256), dtype=jnp.bfloat16)
    w4 = jax.random.normal(kw, (256,), dtype=jnp.float32) * 0.1 + 1.0
    o4 = jax.block_until_ready(rmsnorm(x4, w4, eps=1e-6))
    assert o4.shape == x4.shape and o4.dtype == jnp.bfloat16
    assert jnp.allclose(o4.astype(jnp.float32),
                        rmsnorm_ref(x4, w4).astype(jnp.float32),
                        atol=2e-2, rtol=2e-2)

    print("KERNEL_OK")
</pallas_src>

<mosaic_0001>
module attributes {stable_mosaic.version = 11 : i64} {
  func.func @_rmsnorm_kernel(%arg0: i32, %arg1: memref<16x32xf32, #tpu.memory_space<vmem>>, %arg2: memref<1x32xf32, #tpu.memory_space<vmem>>, %arg3: memref<16x32xf32, #tpu.memory_space<vmem>>) attributes {dimension_semantics = [#tpu.dimension_semantics<parallel>], iteration_bounds = array<i64: 1>, scalar_prefetch = 0 : i64, scratch_operands = 0 : i64, tpu.core_type = #tpu.core_type<tc>, window_params = [{transform_indices = @transform_0, window_bounds = array<i64: 16, 32>}, {pipeline_mode = #tpu.pipeline_mode<synchronous>, transform_indices = @transform_1, window_bounds = array<i64: 1, 32>}, {transform_indices = @transform_2, window_bounds = array<i64: 16, 32>}]} {
    %c0 = arith.constant 0 : index
    %c0_0 = arith.constant 0 : index
    %0 = vector.load %arg1[%c0, %c0_0] : memref<16x32xf32, #tpu.memory_space<vmem>>, vector<16x32xf32>
    %1 = arith.mulf %0, %0 : vector<16x32xf32>
    %cst = arith.constant dense<0.000000e+00> : vector<16xf32>
    %2 = vector.multi_reduction <add>, %1, %cst [1] : vector<16x32xf32> to vector<16xf32>
    %3 = vector.shape_cast %2 : vector<16xf32> to vector<16x1xf32>
    %cst_1 = arith.constant 3.125000e-02 : f32
    %4 = vector.broadcast %cst_1 : f32 to vector<16x1xf32>
    %5 = arith.mulf %3, %4 : vector<16x1xf32>
    %cst_2 = arith.constant 9.99999997E-7 : f32
    %6 = vector.broadcast %cst_2 : f32 to vector<16x1xf32>
    %7 = arith.addf %5, %6 : vector<16x1xf32>
    %8 = math.rsqrt %7 : vector<16x1xf32>
    %9 = vector.broadcast %8 : vector<16x1xf32> to vector<16x32xf32>
    %10 = arith.mulf %0, %9 : vector<16x32xf32>
    %c0_3 = arith.constant 0 : index
    %c0_4 = arith.constant 0 : index
    %11 = vector.load %arg2[%c0_3, %c0_4] : memref<1x32xf32, #tpu.memory_space<vmem>>, vector<1x32xf32>
    %12 = vector.broadcast %11 : vector<1x32xf32> to vector<16x32xf32>
    %13 = arith.mulf %10, %12 : vector<16x32xf32>
    %c0_5 = arith.constant 0 : index
    %c0_6 = arith.constant 0 : index
    %14 = vector.load %arg3[%c0_5, %c0_6] : memref<16x32xf32, #tpu.memory_space<vmem>>, vector<16x32xf32>
    tpu.vector_store %arg3[%c0_5, %c0_6], %13 {strides = array<i32>} : memref<16x32xf32, #tpu.memory_space<vmem>>, vector<16x32xf32>,
    return
  }
  func.func @transform_0(%arg0: i32) -> (i32, i32) {
    %c0_i32 = arith.constant 0 : i32
    %c0_i32_0 = arith.constant 0 : i32
    return %arg0, %c0_i32 : i32, i32
  }
  func.func @transform_1(%arg0: i32) -> (i32, i32) {
    %c0_i32 = arith.constant 0 : i32
    %c0_i32_0 = arith.constant 0 : i32
    %c0_i32_1 = arith.constant 0 : i32
    return %c0_i32, %c0_i32_0 : i32, i32
  }
  func.func @transform_2(%arg0: i32) -> (i32, i32) {
    %c0_i32 = arith.constant 0 : i32
    %c0_i32_0 = arith.constant 0 : i32
    return %arg0, %c0_i32 : i32, i32
  }
}

</mosaic_0001>

<llo_original>
// kernel: tpu_custom_call.1
$region0: #{tpu_custom_call.1}
  #allocation0 [shape = 'u32[]', space=smem, size = 0x4, offset = 0x4, fixed_abs, tag = 'smem constant byte address 0x4 - core index']
  #allocation1 [shape = 'u32[144,128]{1,0:T(1,128)}', space=vmem, size = 0x12000, scoped, tag = 'internal scratch']
  %s0 = inlined_call_operand.hbm [shape: f32[16,32], index: 0, kind: input, shape index: {}]
  %s1 = inlined_call_operand.vmem [shape: f32[1,32], index: 1, kind: input, shape index: {}]
  %s2 = inlined_call_operand.hbm [shape: f32[16,32], index: 2, kind: output, shape index: {}]
  %s3 = sld [smem:[#allocation0]]
  $region22: #{tpu_custom_call.1} parent=0
    _
  %s5 = ssub.s32 1, %s3
  %s6 = scalar_select 0, %s5, %s3
  $region1: #{tpu_custom_call.1} parent=0
    #allocation2 [shape = 'u8[8192]{0}', space=vmem, size = 0x2000, scoped, tag = 'input window, operand 0, single buffered']
    #allocation3 [shape = 's32[1]{0}', space=sflag, size = 0x4, scoped, tag = 'scoped memory for tpu_custom_call.1']
    #allocation4 [shape = 's32[1]{0}', space=sflag, size = 0x4, scoped, tag = 'scoped memory for tpu_custom_call.1']
    #allocation5 [shape = 'u8[8192]{0}', space=vmem, size = 0x2000, scoped, tag = 'output window, operand 0, single buffered']
    %7 = vsyncpa [#allocation3], 0
    %8 = vsyncpa [#allocation4], 0
    // Predicated region
    $region2: #{tpu_custom_call.1} parent=1 // pred_check
      _
    $region3: #{tpu_custom_call.1} parent=1 // pred_check_branch
      %10 = sbr.rel (0) target = $region5
    $region4: #{tpu_custom_call.1} parent=1 // pred_region
      %s12 = ssub.s32 256, 256
      %13 = vsyncadd [#allocation3], %s12
      %s14 = sshll.u32 [#allocation2], 4
      %s15 = int_to_ptr.vmem [resolvable:$true] %s14
      %20 = dma.hbm_to_vmem [thread:$0]  %s0, 256, %s15, [#allocation3], 128, 128, 8
    $region5: #{tpu_custom_call.1} parent=1 // pred_fallthru
      _
    // Predicated region
    $region6: #{tpu_custom_call.1} parent=1 // pred_check
      _
    $region7: #{tpu_custom_call.1} parent=1 // pred_check_branch
      %22 = sbr.rel (0) target = $region9
    $region8: #{tpu_custom_call.1} parent=1 // pred_region
      _
    $region9: #{tpu_custom_call.1} parent=1 // pred_fallthru
      _
    // Predicated region
    $region10: #{tpu_custom_call.1} parent=1 // pred_check
      _
    $region11: #{tpu_custom_call.1} parent=1 // pred_check_branch
      %24 = sbr.rel (0) target = $region13
    $region12: #{tpu_custom_call.1} parent=1 // pred_region
      %25 = dma.done [#allocation3], 256
    $region13: #{tpu_custom_call.1} parent=1 // pred_fallthru
      _
    %v26 = vld [vmem:[#allocation2] sm:$0xff]
    %v27 = vld [vmem:[#allocation2 + $0x8] sm:$0xff]
    %v28 = vmul.f32 %v26, %v26
    %v29 = vmul.f32 %v27, %v27
    %vm30 = vcmask 261120
    %v31 = vsel %vm30, %v28, 0.0
    %32 = vadd.xlane.f32.xlu0 %v31
    %v33 = vpop.xlane.xlu0 %32
    %v34 = vsel %vm30, %v29, 0.0
    %35 = vadd.xlane.f32.xlu0 %v34
    %v36 = vpop.xlane.xlu0 %35
    %v37 = vmul.f32 %v33, 0.03125
    %v38 = vmul.f32 %v36, 0.03125
    %v39 = vadd.f32 %v37, 1e-06
    %v40 = vadd.f32 %v38, 1e-06
    %v41 = vrsqrt.pop %v39
    %v42 = vrsqrt.pop %v40
    %v43 = vmul.f32 %v26, %v41
    %v44 = vmul.f32 %v27, %v42
    %v45 = vld [vmem:[%s1] sm:$0x1]
    %v47 = vlaneseq
    %v48 = vshrl.u32 %v47, 7
    %v49 = vsub.s32 0, %v48
    %v50 = vrot.slane %v45, %v49
    %v52 = vmul.f32 %v43, %v50
    %v53 = vmul.f32 %v44, %v50
    %54 = vst.msk [vmem:[#allocation5] sm:$0xff] %vm30, %v52
    %55 = vst.msk [vmem:[#allocation5 + $0x8] sm:$0xff] %vm30, %v53
    // Predicated region
    $region14: #{tpu_custom_call.1} parent=1 // pred_check
      _
    $region15: #{tpu_custom_call.1} parent=1 // pred_check_branch
      %57 = sbr.rel (0) target = $region17
    $region16: #{tpu_custom_call.1} parent=1 // pred_region
      %s59 = ssub.s32 256, 256
      %60 = vsyncadd [#allocation4], %s59
      %s61 = sshll.u32 [#allocation5], 4
      %s62 = int_to_ptr.vmem [resolvable:$true] %s61
      %67 = dma.vmem_to_hbm [thread:$0]  %s62, 256, %s2, [#allocation4], 128, 128, 8
    $region17: #{tpu_custom_call.1} parent=1 // pred_fallthru
      _
    // Predicated region
    $region18: #{tpu_custom_call.1} parent=1 // pred_check
      _
    $region19: #{tpu_custom_call.1} parent=1 // pred_check_branch
      %69 = sbr.rel (0) target = $region21
    $region20: #{tpu_custom_call.1} parent=1 // pred_region
      %70 = dma.done [#allocation4], 256
    $region21: #{tpu_custom_call.1} parent=1 // pred_fallthru
      _
    %71 = vsyncpa [#allocation3], 1
    %72 = vsyncpa [#allocation4], 1

</llo_original>
